<compile_context>
chip_gen: v7x
topology: tpu7x:2x2x1
jax: 0.10.0
libtpu: 0.0.40
codegen_flags: <defaults>
</compile_context>

<pallas_src>
import jax
import jax.numpy as jnp
import numpy as np
from jax import lax
from jax.experimental import pallas as pl
from jax.experimental.pallas import tpu as pltpu


def keyword_attention_kernel(mask_ref, x_ref, wqkv_ref, bqkv_ref, wo_ref, misc_ref,
                             out_ref):
    """Per-batch block kernel (grid = (B,), batch dim squeezed).

    mask_ref : (1, S)    int32 keyword mask for this batch element (1 = keyword/keep)
    x_ref    : (S, E)    f32 activations for this batch element
    wqkv_ref : (3, E, E) bf16 pre-transposed projection weights [Wq^T, Wk^T, Wv^T]
    bqkv_ref : (3, E)    f32 projection biases [bq, bk, bv]
    wo_ref   : (E, E)    bf16 pre-transposed output projection weight
    misc_ref : (3, E)    f32 rows = [out-proj bias, LN gamma, LN beta]
    out_ref  : (S, E)    f32
    """
    x = x_ref[...]                                      # (S, E) f32
    E = x.shape[-1]
    scale = 1.0 / jnp.sqrt(jnp.float32(E))
    x_bf = x.astype(jnp.bfloat16)

    # Three separate (E,E) MXU matmuls (each weight slab is its own tile) --
    # avoids non-lane-aligned slicing of a fused (S, 3E) result at E=32.
    q = jnp.dot(x_bf, wqkv_ref[0], preferred_element_type=jnp.float32) + bqkv_ref[0:1, :]
    k = jnp.dot(x_bf, wqkv_ref[1], preferred_element_type=jnp.float32) + bqkv_ref[1:2, :]
    v = jnp.dot(x_bf, wqkv_ref[2], preferred_element_type=jnp.float32) + bqkv_ref[2:3, :]
    q = q * scale

    # (S, S) scores, f32 accumulation; key_padding_mask built in-kernel from (1, S).
    scores = lax.dot_general(q.astype(jnp.bfloat16), k.astype(jnp.bfloat16),
                             (((1,), (1,)), ((), ())),
                             preferred_element_type=jnp.float32)
    keep = mask_ref[...] > 0                            # (1, S) -> broadcast over queries
    scores = jnp.where(keep, scores, -1e30)             # finite mask: no -inf -> NaN hazard

    # Softmax in f32 (EUP for exp / approx reciprocal).
    m = jnp.max(scores, axis=-1, keepdims=True)
    p = jnp.exp(scores - m)
    denom = jnp.sum(p, axis=-1, keepdims=True)
    probs = p * pl.reciprocal(denom, approx=True)

    attn = jnp.dot(probs.astype(jnp.bfloat16), v.astype(jnp.bfloat16),
                   preferred_element_type=jnp.float32)  # (S, E)
    attn_out = (jnp.dot(attn.astype(jnp.bfloat16), wo_ref[...],
                        preferred_element_type=jnp.float32) + misc_ref[0:1, :])

    # Residual + LayerNorm (f32, eps = 1e-5, PyTorch default).
    y = x + attn_out
    mu = jnp.mean(y, axis=-1, keepdims=True)
    var = jnp.mean((y - mu) ** 2, axis=-1, keepdims=True)
    yn = (y - mu) * lax.rsqrt(var + 1e-5)
    out_ref[...] = yn * misc_ref[1:2, :] + misc_ref[2:3, :]


def keyword_attention_layer(bert_output, keyword_mask, params):
    """bert_output: (S, B, E) float32; keyword_mask: (B, S) with 1 = keyword, 0 = pad."""
    S, B, E = bert_output.shape
    wq, wk, wv, bq, bk, bv, wo, bo, gamma, beta = params

    # One wrapper transpose to batch-major so each grid step gets a contiguous
    # (S, E) block; mask stays tiny (B*S ints) and is expanded inside the kernel.
    x = jnp.transpose(bert_output, (1, 0, 2))                       # (B, S, E)
    mask = keyword_mask.astype(jnp.int32).reshape(B, 1, S)          # (B, 1, S)

    # One-time parameter plumbing: pre-transposed bf16 weights, packed f32 vectors.
    w_qkv_t = jnp.stack([wq.T, wk.T, wv.T]).astype(jnp.bfloat16)    # (3, E, E)
    b_qkv = jnp.stack([bq, bk, bv]).astype(jnp.float32)             # (3, E)
    wo_t = wo.T.astype(jnp.bfloat16)                                # (E, E)
    misc = jnp.stack([bo, gamma, beta]).astype(jnp.float32)         # (3, E)

    cost = pl.CostEstimate(
        flops=int(B * (8 * S * E * E + 4 * S * S * E)),
        transcendentals=int(B * (S * S + 2 * S)),
        bytes_accessed=int(2 * B * S * E * 4 + 4 * E * E * 2 + 6 * E * 4 + B * S * 4),
    )

    out = pl.pallas_call(
        keyword_attention_kernel,
        out_shape=jax.ShapeDtypeStruct((B, S, E), jnp.float32),
        grid_spec=pltpu.PrefetchScalarGridSpec(
            num_scalar_prefetch=0,
            grid=(B,),
            in_specs=[
                pl.BlockSpec((None, 1, S), lambda b: (b, 0, 0)),    # keyword mask
                pl.BlockSpec((None, S, E), lambda b: (b, 0, 0)),    # activations
                pl.BlockSpec((3, E, E), lambda b: (0, 0, 0)),       # Wqkv (resident)
                pl.BlockSpec((3, E), lambda b: (0, 0)),             # bq/bk/bv
                pl.BlockSpec((E, E), lambda b: (0, 0)),             # Wo
                pl.BlockSpec((3, E), lambda b: (0, 0)),             # bo/gamma/beta
            ],
            out_specs=pl.BlockSpec((None, S, E), lambda b: (b, 0, 0)),
        ),
        compiler_params=pltpu.CompilerParams(
            dimension_semantics=("parallel",),      # shards batch across v7x TCs
            vmem_limit_bytes=32 << 20,
        ),
        cost_estimate=cost,
    )(mask, x, w_qkv_t, b_qkv, wo_t, misc)

    return jnp.transpose(out, (1, 0, 2))                            # back to (S, B, E)


def reference(bert_output, keyword_mask, params):
    """Pure-JAX f32 reference matching torch.nn.MultiheadAttention(1 head) + LayerNorm."""
    wq, wk, wv, bq, bk, bv, wo, bo, gamma, beta = params
    S, B, E = bert_output.shape
    x = jnp.transpose(bert_output, (1, 0, 2))                 # (B, S, E)
    q = x @ wq.T + bq
    k = x @ wk.T + bk
    v = x @ wv.T + bv
    scores = jnp.einsum('bqe,bke->bqk', q, k) / jnp.sqrt(jnp.float32(E))
    keep = keyword_mask.astype(bool)[:, None, :]               # (B, 1, S)
    scores = jnp.where(keep, scores, -jnp.inf)
    probs = jax.nn.softmax(scores, axis=-1)
    attn = jnp.einsum('bqk,bke->bqe', probs, v) @ wo.T + bo
    y = x + attn
    mu = jnp.mean(y, axis=-1, keepdims=True)
    var = jnp.mean((y - mu) ** 2, axis=-1, keepdims=True)
    out = (y - mu) / jnp.sqrt(var + 1e-5) * gamma + beta
    return jnp.transpose(out, (1, 0, 2))


if __name__ == "__main__":
    S, B, E = 8, 2, 32   # seq=8, batch=2, hidden=32, attention_heads=1
    key = jax.random.PRNGKey(0)
    ks = jax.random.split(key, 8)

    bert_output = jax.random.normal(ks[0], (S, B, E), dtype=jnp.float32)
    # keyword_mask: (B, S) with 1 = keyword position; ensure at least one keep per row.
    keyword_mask = (jax.random.uniform(ks[1], (B, S)) > 0.4).astype(jnp.int32)
    keyword_mask = keyword_mask.at[:, 0].set(1)

    # Deterministic parameter init (shapes per nn.MultiheadAttention / nn.LayerNorm).
    sc = 1.0 / np.sqrt(E)
    wq = jax.random.uniform(ks[2], (E, E), minval=-sc, maxval=sc, dtype=jnp.float32)
    wk = jax.random.uniform(ks[3], (E, E), minval=-sc, maxval=sc, dtype=jnp.float32)
    wv = jax.random.uniform(ks[4], (E, E), minval=-sc, maxval=sc, dtype=jnp.float32)
    bq = jax.random.uniform(ks[5], (E,), minval=-sc, maxval=sc, dtype=jnp.float32)
    bk = jnp.zeros((E,), jnp.float32)
    bv = jax.random.uniform(ks[6], (E,), minval=-sc, maxval=sc, dtype=jnp.float32)
    wo = jax.random.uniform(ks[7], (E, E), minval=-sc, maxval=sc, dtype=jnp.float32)
    bo = jnp.zeros((E,), jnp.float32)
    gamma = jnp.ones((E,), jnp.float32)
    beta = jnp.zeros((E,), jnp.float32)
    params = (wq, wk, wv, bq, bk, bv, wo, bo, gamma, beta)

    out = keyword_attention_layer(bert_output, keyword_mask, params)
    out = jax.block_until_ready(out)

    ref = reference(bert_output, keyword_mask, params)
    # Tolerance reflects bf16 MXU inputs (f32 accumulation) + approx reciprocal;
    # the f32-everywhere variant matches to ~1e-5.
    np.testing.assert_allclose(np.asarray(out), np.asarray(ref), rtol=2e-2, atol=2e-2)

    print("KERNEL_OK")
</pallas_src>

<mosaic_0001>
module attributes {stable_mosaic.version = 11 : i64} {
  func.func @keyword_attention_kernel(%arg0: i32, %arg1: memref<1x1x8xi32, #tpu.memory_space<vmem>>, %arg2: memref<1x8x32xf32, #tpu.memory_space<vmem>>, %arg3: memref<3x32x32xbf16, #tpu.memory_space<vmem>>, %arg4: memref<3x32xf32, #tpu.memory_space<vmem>>, %arg5: memref<32x32xbf16, #tpu.memory_space<vmem>>, %arg6: memref<3x32xf32, #tpu.memory_space<vmem>>, %arg7: memref<1x8x32xf32, #tpu.memory_space<vmem>>) attributes {dimension_semantics = [#tpu.dimension_semantics<parallel>], iteration_bounds = array<i64: 2>, scalar_prefetch = 0 : i64, scratch_operands = 0 : i64, tpu.core_type = #tpu.core_type<tc>, window_params = [{transform_indices = @transform_0, window_bounds = array<i64: 1, 1, 8>}, {transform_indices = @transform_1, window_bounds = array<i64: 1, 8, 32>}, {pipeline_mode = #tpu.pipeline_mode<synchronous>, transform_indices = @transform_2, window_bounds = array<i64: 3, 32, 32>}, {pipeline_mode = #tpu.pipeline_mode<synchronous>, transform_indices = @transform_3, window_bounds = array<i64: 3, 32>}, {pipeline_mode = #tpu.pipeline_mode<synchronous>, transform_indices = @transform_4, window_bounds = array<i64: 32, 32>}, {pipeline_mode = #tpu.pipeline_mode<synchronous>, transform_indices = @transform_5, window_bounds = array<i64: 3, 32>}, {transform_indices = @transform_6, window_bounds = array<i64: 1, 8, 32>}]} {
    %c0 = arith.constant 0 : index
    %c0_0 = arith.constant 0 : index
    %c0_1 = arith.constant 0 : index
    %0 = vector.load %arg2[%c0, %c0_0, %c0_1] : memref<1x8x32xf32, #tpu.memory_space<vmem>>, vector<1x8x32xf32>
    %1 = vector.shape_cast %0 : vector<1x8x32xf32> to vector<8x32xf32>
    %cst = arith.constant 3.200000e+01 : f32
    %2 = math.sqrt %cst : f32
    %cst_2 = arith.constant 1.000000e+00 : f32
    %3 = arith.divf %cst_2, %2 : f32
    %4 = arith.truncf %1 : vector<8x32xf32> to vector<8x32xbf16>
    %c0_3 = arith.constant 0 : index
    %c0_4 = arith.constant 0 : index
    %c0_5 = arith.constant 0 : index
    %5 = vector.load %arg3[%c0_3, %c0_4, %c0_5] : memref<3x32x32xbf16, #tpu.memory_space<vmem>>, vector<1x32x32xbf16>
    %6 = vector.shape_cast %5 : vector<1x32x32xbf16> to vector<32x32xbf16>
    %cst_6 = arith.constant dense<0.000000e+00> : vector<8x32xf32>
    %7 = tpu.matmul %4, %6, %cst_6 {dimension_numbers = #tpu.dot_dimension_numbers<[1], [0], [0], [1], [0, 0, 1, 1], [], []>} : vector<8x32xbf16>, vector<32x32xbf16>, vector<8x32xf32> -> vector<8x32xf32>
    %c0_7 = arith.constant 0 : index
    %c0_8 = arith.constant 0 : index
    %8 = vector.load %arg4[%c0_7, %c0_8] : memref<3x32xf32, #tpu.memory_space<vmem>>, vector<1x32xf32>
    %9 = vector.broadcast %8 : vector<1x32xf32> to vector<8x32xf32>
    %10 = arith.addf %7, %9 : vector<8x32xf32>
    %c1 = arith.constant 1 : index
    %c0_9 = arith.constant 0 : index
    %c0_10 = arith.constant 0 : index
    %11 = vector.load %arg3[%c1, %c0_9, %c0_10] : memref<3x32x32xbf16, #tpu.memory_space<vmem>>, vector<1x32x32xbf16>
    %12 = vector.shape_cast %11 : vector<1x32x32xbf16> to vector<32x32xbf16>
    %cst_11 = arith.constant dense<0.000000e+00> : vector<8x32xf32>
    %13 = tpu.matmul %4, %12, %cst_11 {dimension_numbers = #tpu.dot_dimension_numbers<[1], [0], [0], [1], [0, 0, 1, 1], [], []>} : vector<8x32xbf16>, vector<32x32xbf16>, vector<8x32xf32> -> vector<8x32xf32>
    %c1_12 = arith.constant 1 : index
    %c0_13 = arith.constant 0 : index
    %14 = vector.load %arg4[%c1_12, %c0_13] : memref<3x32xf32, #tpu.memory_space<vmem>>, vector<1x32xf32>
    %15 = vector.broadcast %14 : vector<1x32xf32> to vector<8x32xf32>
    %16 = arith.addf %13, %15 : vector<8x32xf32>
    %c2 = arith.constant 2 : index
    %c0_14 = arith.constant 0 : index
    %c0_15 = arith.constant 0 : index
    %17 = vector.load %arg3[%c2, %c0_14, %c0_15] : memref<3x32x32xbf16, #tpu.memory_space<vmem>>, vector<1x32x32xbf16>
    %18 = vector.shape_cast %17 : vector<1x32x32xbf16> to vector<32x32xbf16>
    %cst_16 = arith.constant dense<0.000000e+00> : vector<8x32xf32>
    %19 = tpu.matmul %4, %18, %cst_16 {dimension_numbers = #tpu.dot_dimension_numbers<[1], [0], [0], [1], [0, 0, 1, 1], [], []>} : vector<8x32xbf16>, vector<32x32xbf16>, vector<8x32xf32> -> vector<8x32xf32>
    %c2_17 = arith.constant 2 : index
    %c0_18 = arith.constant 0 : index
    %20 = vector.load %arg4[%c2_17, %c0_18] : memref<3x32xf32, #tpu.memory_space<vmem>>, vector<1x32xf32>
    %21 = vector.broadcast %20 : vector<1x32xf32> to vector<8x32xf32>
    %22 = arith.addf %19, %21 : vector<8x32xf32>
    %23 = vector.broadcast %3 : f32 to vector<8x32xf32>
    %24 = arith.mulf %10, %23 : vector<8x32xf32>
    %25 = arith.truncf %24 : vector<8x32xf32> to vector<8x32xbf16>
    %26 = arith.truncf %16 : vector<8x32xf32> to vector<8x32xbf16>
    %cst_19 = arith.constant dense<0.000000e+00> : vector<8x8xf32>
    %27 = tpu.matmul %25, %26, %cst_19 {dimension_numbers = #tpu.dot_dimension_numbers<[1], [1], [0], [0], [0, 0, 1, 0], [], []>} : vector<8x32xbf16>, vector<8x32xbf16>, vector<8x8xf32> -> vector<8x8xf32>
    %c0_20 = arith.constant 0 : index
    %c0_21 = arith.constant 0 : index
    %c0_22 = arith.constant 0 : index
    %28 = vector.load %arg1[%c0_20, %c0_21, %c0_22] : memref<1x1x8xi32, #tpu.memory_space<vmem>>, vector<1x1x8xi32>
    %29 = vector.shape_cast %28 : vector<1x1x8xi32> to vector<1x8xi32>
    %c0_i32 = arith.constant 0 : i32
    %30 = vector.broadcast %c0_i32 : i32 to vector<1x8xi32>
    %31 = arith.cmpi sgt, %29, %30 : vector<1x8xi32>
    %cst_23 = arith.constant -1.000000e+30 : f32
    %32 = vector.shape_cast %31 : vector<1x8xi1> to vector<1x8xi1>
    %33 = vector.broadcast %32 : vector<1x8xi1> to vector<8x8xi1>
    %34 = vector.broadcast %cst_23 : f32 to vector<8x8xf32>
    %35 = arith.select %33, %27, %34 : vector<8x8xi1>, vector<8x8xf32>
    %cst_24 = arith.constant dense<0xFF800000> : vector<8xf32>
    %36 = vector.multi_reduction <maximumf>, %35, %cst_24 [1] : vector<8x8xf32> to vector<8xf32>
    %37 = vector.shape_cast %36 : vector<8xf32> to vector<8x1xf32>
    %38 = vector.broadcast %37 : vector<8x1xf32> to vector<8x8xf32>
    %39 = arith.subf %35, %38 : vector<8x8xf32>
    %40 = math.exp %39 : vector<8x8xf32>
    %cst_25 = arith.constant dense<0.000000e+00> : vector<8xf32>
    %41 = vector.multi_reduction <add>, %40, %cst_25 [1] : vector<8x8xf32> to vector<8xf32>
    %42 = vector.shape_cast %41 : vector<8xf32> to vector<8x1xf32>
    %43 = tpu.reciprocal %42 {approx = true} : vector<8x1xf32> -> vector<8x1xf32>
    %44 = vector.broadcast %43 : vector<8x1xf32> to vector<8x8xf32>
    %45 = arith.mulf %40, %44 : vector<8x8xf32>
    %46 = arith.truncf %45 : vector<8x8xf32> to vector<8x8xbf16>
    %47 = arith.truncf %22 : vector<8x32xf32> to vector<8x32xbf16>
    %cst_26 = arith.constant dense<0.000000e+00> : vector<8x32xf32>
    %48 = tpu.matmul %46, %47, %cst_26 {dimension_numbers = #tpu.dot_dimension_numbers<[1], [0], [0], [1], [0, 0, 1, 1], [], []>} : vector<8x8xbf16>, vector<8x32xbf16>, vector<8x32xf32> -> vector<8x32xf32>
    %49 = arith.truncf %48 : vector<8x32xf32> to vector<8x32xbf16>
    %c0_27 = arith.constant 0 : index
    %c0_28 = arith.constant 0 : index
    %50 = vector.load %arg5[%c0_27, %c0_28] : memref<32x32xbf16, #tpu.memory_space<vmem>>, vector<32x32xbf16>
    %cst_29 = arith.constant dense<0.000000e+00> : vector<8x32xf32>
    %51 = tpu.matmul %49, %50, %cst_29 {dimension_numbers = #tpu.dot_dimension_numbers<[1], [0], [0], [1], [0, 0, 1, 1], [], []>} : vector<8x32xbf16>, vector<32x32xbf16>, vector<8x32xf32> -> vector<8x32xf32>
    %c0_30 = arith.constant 0 : index
    %c0_31 = arith.constant 0 : index
    %52 = vector.load %arg6[%c0_30, %c0_31] : memref<3x32xf32, #tpu.memory_space<vmem>>, vector<1x32xf32>
    %53 = vector.broadcast %52 : vector<1x32xf32> to vector<8x32xf32>
    %54 = arith.addf %51, %53 : vector<8x32xf32>
    %55 = arith.addf %1, %54 : vector<8x32xf32>
    %cst_32 = arith.constant dense<0.000000e+00> : vector<8xf32>
    %56 = vector.multi_reduction <add>, %55, %cst_32 [1] : vector<8x32xf32> to vector<8xf32>
    %57 = vector.shape_cast %56 : vector<8xf32> to vector<8x1xf32>
    %cst_33 = arith.constant 3.200000e+01 : f32
    %58 = vector.broadcast %cst_33 : f32 to vector<8x1xf32>
    %59 = arith.divf %57, %58 : vector<8x1xf32>
    %60 = vector.broadcast %59 : vector<8x1xf32> to vector<8x32xf32>
    %61 = arith.subf %55, %60 : vector<8x32xf32>
    %62 = arith.mulf %61, %61 : vector<8x32xf32>
    %cst_34 = arith.constant dense<0.000000e+00> : vector<8xf32>
    %63 = vector.multi_reduction <add>, %62, %cst_34 [1] : vector<8x32xf32> to vector<8xf32>
    %64 = vector.shape_cast %63 : vector<8xf32> to vector<8x1xf32>
    %cst_35 = arith.constant 3.200000e+01 : f32
    %65 = vector.broadcast %cst_35 : f32 to vector<8x1xf32>
    %66 = arith.divf %64, %65 : vector<8x1xf32>
    %67 = vector.broadcast %59 : vector<8x1xf32> to vector<8x32xf32>
    %68 = arith.subf %55, %67 : vector<8x32xf32>
    %cst_36 = arith.constant 9.99999974E-6 : f32
    %69 = vector.broadcast %cst_36 : f32 to vector<8x1xf32>
    %70 = arith.addf %66, %69 : vector<8x1xf32>
    %71 = math.rsqrt %70 : vector<8x1xf32>
    %72 = vector.broadcast %71 : vector<8x1xf32> to vector<8x32xf32>
    %73 = arith.mulf %68, %72 : vector<8x32xf32>
    %c1_37 = arith.constant 1 : index
    %c0_38 = arith.constant 0 : index
    %74 = vector.load %arg6[%c1_37, %c0_38] : memref<3x32xf32, #tpu.memory_space<vmem>>, vector<1x32xf32>
    %75 = vector.broadcast %74 : vector<1x32xf32> to vector<8x32xf32>
    %76 = arith.mulf %73, %75 : vector<8x32xf32>
    %c2_39 = arith.constant 2 : index
    %c0_40 = arith.constant 0 : index
    %77 = vector.load %arg6[%c2_39, %c0_40] : memref<3x32xf32, #tpu.memory_space<vmem>>, vector<1x32xf32>
    %78 = vector.broadcast %77 : vector<1x32xf32> to vector<8x32xf32>
    %79 = arith.addf %76, %78 : vector<8x32xf32>
    %c0_41 = arith.constant 0 : index
    %c0_42 = arith.constant 0 : index
    %c0_43 = arith.constant 0 : index
    %80 = vector.load %arg7[%c0_41, %c0_42, %c0_43] : memref<1x8x32xf32, #tpu.memory_space<vmem>>, vector<1x8x32xf32>
    %81 = vector.shape_cast %80 : vector<1x8x32xf32> to vector<8x32xf32>
    %82 = vector.shape_cast %79 : vector<8x32xf32> to vector<1x8x32xf32>
    tpu.vector_store %arg7[%c0_41, %c0_42, %c0_43], %82 {strides = array<i32>} : memref<1x8x32xf32, #tpu.memory_space<vmem>>, vector<1x8x32xf32>,
    return
  }
  func.func @transform_0(%arg0: i32) -> (i32, i32, i32) {
    %c0_i32 = arith.constant 0 : i32
    %c0_i32_0 = arith.constant 0 : i32
    %c0_i32_1 = arith.constant 0 : i32
    return %arg0, %c0_i32, %c0_i32_0 : i32, i32, i32
  }
  func.func @transform_1(%arg0: i32) -> (i32, i32, i32) {
    %c0_i32 = arith.constant 0 : i32
    %c0_i32_0 = arith.constant 0 : i32
    %c0_i32_1 = arith.constant 0 : i32
    return %arg0, %c0_i32, %c0_i32_0 : i32, i32, i32
  }
  func.func @transform_2(%arg0: i32) -> (i32, i32, i32) {
    %c0_i32 = arith.constant 0 : i32
    %c0_i32_0 = arith.constant 0 : i32
    %c0_i32_1 = arith.constant 0 : i32
    %c0_i32_2 = arith.constant 0 : i32
    return %c0_i32, %c0_i32_0, %c0_i32_1 : i32, i32, i32
  }
  func.func @transform_3(%arg0: i32) -> (i32, i32) {
    %c0_i32 = arith.constant 0 : i32
    %c0_i32_0 = arith.constant 0 : i32
    %c0_i32_1 = arith.constant 0 : i32
    return %c0_i32, %c0_i32_0 : i32, i32
  }
  func.func @transform_4(%arg0: i32) -> (i32, i32) {
    %c0_i32 = arith.constant 0 : i32
    %c0_i32_0 = arith.constant 0 : i32
    %c0_i32_1 = arith.constant 0 : i32
    return %c0_i32, %c0_i32_0 : i32, i32
  }
  func.func @transform_5(%arg0: i32) -> (i32, i32) {
    %c0_i32 = arith.constant 0 : i32
    %c0_i32_0 = arith.constant 0 : i32
    %c0_i32_1 = arith.constant 0 : i32
    return %c0_i32, %c0_i32_0 : i32, i32
  }
  func.func @transform_6(%arg0: i32) -> (i32, i32, i32) {
    %c0_i32 = arith.constant 0 : i32
    %c0_i32_0 = arith.constant 0 : i32
    %c0_i32_1 = arith.constant 0 : i32
    return %arg0, %c0_i32, %c0_i32_0 : i32, i32, i32
  }
}

</mosaic_0001>

<llo_original>
// kernel: tpu_custom_call.1
$region0: #{tpu_custom_call.1}
  #allocation0 [shape = 'u32[]', space=smem, size = 0x4, offset = 0x4, fixed_abs, tag = 'smem constant byte address 0x4 - core index']
  #allocation1 [shape = 'u32[144,128]{1,0:T(1,128)}', space=vmem, size = 0x12000, scoped, tag = 'internal scratch']
  %s0 = inlined_call_operand.hbm [shape: s32[2,1,8], index: 0, kind: input, shape index: {}]
  %s1 = inlined_call_operand.hbm [shape: f32[2,8,32], index: 1, kind: input, shape index: {}]
  %s2 = inlined_call_operand.hbm [shape: bf16[3,32,32], index: 2, kind: input, shape index: {}]
  %s3 = inlined_call_operand.vmem [shape: f32[3,32], index: 3, kind: input, shape index: {}]
  %s4 = inlined_call_operand.hbm [shape: bf16[32,32], index: 4, kind: input, shape index: {}]
  %s5 = inlined_call_operand.vmem [shape: f32[3,32], index: 5, kind: input, shape index: {}]
  %s6 = inlined_call_operand.hbm [shape: f32[2,8,32], index: 6, kind: output, shape index: {}]
  %s7 = sld [smem:[#allocation0]]
  $region73: #{tpu_custom_call.1} parent=0
    _
  %s9 = ssub.s32 1, %s7
  %s10 = scalar_select 0, %s9, %s7
  $region1: #{tpu_custom_call.1} parent=0
    #allocation2 [shape = 'u8[1024]{0}', space=vmem, size = 0x400, scoped, tag = 'input window, operand 0']
    #allocation3 [shape = 's32[2]{0}', space=sflag, size = 0x8, scoped, tag = 'scoped memory for tpu_custom_call.1']
    #allocation4 [shape = 's32[2]{0}', space=sflag, size = 0x8, scoped, tag = 'scoped memory for tpu_custom_call.1']
    #allocation5 [shape = 'u8[8192]{0}', space=vmem, size = 0x2000, scoped, tag = 'input window, operand 1']
    #allocation6 [shape = 's32[2]{0}', space=sflag, size = 0x8, scoped, tag = 'scoped memory for tpu_custom_call.1']
    #allocation7 [shape = 'u8[24576]{0}', space=vmem, size = 0x6000, scoped, tag = 'input window, operand 2, single buffered']
    #allocation8 [shape = 'u8[8192]{0}', space=vmem, size = 0x2000, scoped, tag = 'input window, operand 4, single buffered']
    #allocation9 [shape = 's32[1]{0}', space=sflag, size = 0x4, scoped, tag = 'scoped memory for tpu_custom_call.1']
    #allocation10 [shape = 'u8[8192]{0}', space=vmem, size = 0x2000, scoped, tag = 'output window, operand 0']
    %11 = vsyncpa [#allocation3], 0
    %s12 = scalar_lea.sflag [#allocation3], 1
    %13 = vsyncpa %s12, 0
    %14 = vsyncpa [#allocation6], 0
    %s15 = scalar_lea.sflag [#allocation6], 1
    %16 = vsyncpa %s15, 0
    %17 = vsyncpa [#allocation9], 0
    %18 = vsyncpa [#allocation4], 0
    %s19 = scalar_lea.sflag [#allocation4], 1
    %20 = vsyncpa %s19, 0
    loop: start=0, step=1, limit=4
    $region2: #{tpu_custom_call.1} parent=1 // loop_pre_header
      _
    $region3: #{tpu_custom_call.1} parent=1 // loop_header
      %s22 = sphi 0, %s26
      %p23 = scmp.ge.s32.totalorder %s22, 4
      %s32 = sphi 0, %s34
      %s35 = sphi 0, %s32
      %s36 = sphi 0, %s35
      %s52 = sphi 0, %s36
      %s58 = sphi 0, %s60
      %s61 = sphi 0, %s58
      %s62 = sphi 0, %s61
      %s78 = sphi 0, %s62
      %s82 = sphi 0, %s82
      %s84 = sphi 0, %s82
      %s85 = sphi 0, %s84
      %s99 = sphi 0, %s85
      %s103 = sphi 0, %s103
      %s105 = sphi 0, %s103
      %s106 = sphi 0, %s105
      %s120 = sphi 0, %s106
      %s124 = sphi 0, %s124
      %s126 = sphi 0, %s124
      %s127 = sphi 0, %s126
      %s141 = sphi 0, %s127
      %s145 = sphi 0, %s145
      %s147 = sphi 0, %s145
      %s148 = sphi 0, %s147
      %s162 = sphi 0, %s148
      %s168 = sphi 0, %s170
      %s171 = sphi 0, %s168
      %s172 = sphi 0, %s171
      %s188 = sphi 0, %s172
    $region4: #{tpu_custom_call.1} parent=1 // loop_header_branch
      %25 = sbr.rel (%p23) target = $region8
    $region5: #{tpu_custom_call.1} parent=1 // loop_body
      %s27 = ssub.s32 %s22, 1
      %s28 = ssub.s32 %s22, 2
      %s29 = sadd.s32 %s22, 1
      %s30 = ssub.s32 %s22, %s29
      %p31 = scmp.eq.s32.totalorder %s30, 0
      %s33 = sadd.s32 %s32, 1
      %s34 = scalar_select %p31, %s32, %s33
      %p37 = pneg %p31
      %p38 = scmp.eq.s32.totalorder %s22, 1
      %p39 = por %p37, %p38
      %p40 = scmp.ne.s32.totalorder %s32, %s35
      %p41 = scmp.eq.s32.totalorder %s22, 0
      %p42 = por %p40, %p41
      %p43 = scmp.ne.s32.totalorder %s32, %s35
      %p44 = scmp.eq.s32.totalorder %s27, 1
      %p45 = por %p43, %p44
      %p46 = scmp.ne.s32.totalorder %s35, %s36
      %p47 = scmp.eq.s32.totalorder %s27, 0
      %p48 = por %p46, %p47
      %p49 = scmp.ne.s32.totalorder %s35, %s36
      %p50 = scmp.eq.s32.totalorder %s28, 1
      %p51 = por %p49, %p50
      %p53 = scmp.ne.s32.totalorder %s36, %s52
      %p54 = scmp.eq.s32.totalorder %s28, 0
      %p55 = por %p53, %p54
      %s56 = ssub.s32 %s22, %s29
      %p57 = scmp.eq.s32.totalorder %s56, 0
      %s59 = sadd.s32 %s58, 1
      %s60 = scalar_select %p57, %s58, %s59
      %p63 = pneg %p57
      %p64 = scmp.eq.s32.totalorder %s22, 1
      %p65 = por %p63, %p64
      %p66 = scmp.ne.s32.totalorder %s58, %s61
      %p67 = scmp.eq.s32.totalorder %s22, 0
      %p68 = por %p66, %p67
      %p69 = scmp.ne.s32.totalorder %s58, %s61
      %p70 = scmp.eq.s32.totalorder %s27, 1
      %p71 = por %p69, %p70
      %p72 = scmp.ne.s32.totalorder %s61, %s62
      %p73 = scmp.eq.s32.totalorder %s27, 0
      %p74 = por %p72, %p73
      %p75 = scmp.ne.s32.totalorder %s61, %s62
      %p76 = scmp.eq.s32.totalorder %s28, 1
      %p77 = por %p75, %p76
      %p79 = scmp.ne.s32.totalorder %s62, %s78
      %p80 = scmp.eq.s32.totalorder %s28, 0
      %p81 = por %p79, %p80
      %s83 = sadd.s32 %s82, 1
      %p86 = scmp.eq.s32.totalorder %s22, 1
      %p87 = scmp.ne.s32.totalorder %s82, %s84
      %p88 = scmp.eq.s32.totalorder %s22, 0
      %p89 = por %p87, %p88
      %p90 = scmp.ne.s32.totalorder %s82, %s84
      %p91 = scmp.eq.s32.totalorder %s27, 1
      %p92 = por %p90, %p91
      %p93 = scmp.ne.s32.totalorder %s84, %s85
      %p94 = scmp.eq.s32.totalorder %s27, 0
      %p95 = por %p93, %p94
      %p96 = scmp.ne.s32.totalorder %s84, %s85
      %p97 = scmp.eq.s32.totalorder %s28, 1
      %p98 = por %p96, %p97
      %p100 = scmp.ne.s32.totalorder %s85, %s99
      %p101 = scmp.eq.s32.totalorder %s28, 0
      %p102 = por %p100, %p101
      %s104 = sadd.s32 %s103, 1
      %p107 = scmp.eq.s32.totalorder %s22, 1
      %p108 = scmp.ne.s32.totalorder %s103, %s105
      %p109 = scmp.eq.s32.totalorder %s22, 0
      %p110 = por %p108, %p109
      %p111 = scmp.ne.s32.totalorder %s103, %s105
      %p112 = scmp.eq.s32.totalorder %s27, 1
      %p113 = por %p111, %p112
      %p114 = scmp.ne.s32.totalorder %s105, %s106
      %p115 = scmp.eq.s32.totalorder %s27, 0
      %p116 = por %p114, %p115
      %p117 = scmp.ne.s32.totalorder %s105, %s106
      %p118 = scmp.eq.s32.totalorder %s28, 1
      %p119 = por %p117, %p118
      %p121 = scmp.ne.s32.totalorder %s106, %s120
      %p122 = scmp.eq.s32.totalorder %s28, 0
      %p123 = por %p121, %p122
      %s125 = sadd.s32 %s124, 1
      %p128 = scmp.eq.s32.totalorder %s22, 1
      %p129 = scmp.ne.s32.totalorder %s124, %s126
      %p130 = scmp.eq.s32.totalorder %s22, 0
      %p131 = por %p129, %p130
      %p132 = scmp.ne.s32.totalorder %s124, %s126
      %p133 = scmp.eq.s32.totalorder %s27, 1
      %p134 = por %p132, %p133
      %p135 = scmp.ne.s32.totalorder %s126, %s127
      %p136 = scmp.eq.s32.totalorder %s27, 0
      %p137 = por %p135, %p136
      %p138 = scmp.ne.s32.totalorder %s126, %s127
      %p139 = scmp.eq.s32.totalorder %s28, 1
      %p140 = por %p138, %p139
      %p142 = scmp.ne.s32.totalorder %s127, %s141
      %p143 = scmp.eq.s32.totalorder %s28, 0
      %p144 = por %p142, %p143
      %s146 = sadd.s32 %s145, 1
      %p149 = scmp.eq.s32.totalorder %s22, 1
      %p150 = scmp.ne.s32.totalorder %s145, %s147
      %p151 = scmp.eq.s32.totalorder %s22, 0
      %p152 = por %p150, %p151
      %p153 = scmp.ne.s32.totalorder %s145, %s147
      %p154 = scmp.eq.s32.totalorder %s27, 1
      %p155 = por %p153, %p154
      %p156 = scmp.ne.s32.totalorder %s147, %s148
      %p157 = scmp.eq.s32.totalorder %s27, 0
      %p158 = por %p156, %p157
      %p159 = scmp.ne.s32.totalorder %s147, %s148
      %p160 = scmp.eq.s32.totalorder %s28, 1
      %p161 = por %p159, %p160
      %p163 = scmp.ne.s32.totalorder %s148, %s162
      %p164 = scmp.eq.s32.totalorder %s28, 0
      %p165 = por %p163, %p164
      %s166 = ssub.s32 %s22, %s29
      %p167 = scmp.eq.s32.totalorder %s166, 0
      %s169 = sadd.s32 %s168, 1
      %s170 = scalar_select %p167, %s168, %s169
      %p173 = pneg %p167
      %p174 = scmp.eq.s32.totalorder %s22, 1
      %p175 = por %p173, %p174
      %p176 = scmp.ne.s32.totalorder %s168, %s171
      %p177 = scmp.eq.s32.totalorder %s22, 0
      %p178 = por %p176, %p177
      %p179 = scmp.ne.s32.totalorder %s168, %s171
      %p180 = scmp.eq.s32.totalorder %s27, 1
      %p181 = por %p179, %p180
      %p182 = scmp.ne.s32.totalorder %s171, %s172
      %p183 = scmp.eq.s32.totalorder %s27, 0
      %p184 = por %p182, %p183
      %p185 = scmp.ne.s32.totalorder %s171, %s172
      %p186 = scmp.eq.s32.totalorder %s28, 1
      %p187 = por %p185, %p186
      %p189 = scmp.ne.s32.totalorder %s172, %s188
      %p190 = scmp.eq.s32.totalorder %s28, 0
      %p191 = por %p189, %p190
      %p192 = scmp.le.s32.totalorder 1, %s22
      %p193 = scmp.lt.s32.totalorder %s22, 3
      %p194 = pnand %p192, %p193
      %p195 = pneg %p194
      // Predicated region
      $region9: #{tpu_custom_call.1} parent=5 // pred_check
        _
      $region10: #{tpu_custom_call.1} parent=5 // pred_check_branch
        %197 = sbr.rel (%p194) target = $region12
      $region11: #{tpu_custom_call.1} parent=5 // pred_region
        %s198 = ssub.s32 %s22, 1
        // Predicated region
        $region13: #{tpu_custom_call.1} parent=11 // pred_check
          %p199 = pneg %p95
        $region14: #{tpu_custom_call.1} parent=11 // pred_check_branch
          %201 = sbr.rel (%p199) target = $region16
        $region15: #{tpu_custom_call.1} parent=11 // pred_region
          %s203 = ssub.s32 768, 768
          %204 = vsyncadd [#allocation6], %s203
          %s205 = sshll.u32 [#allocation7], 4
          %s206 = int_to_ptr.vmem [resolvable:$true] %s205
          %211 = dma.hbm_to_vmem [thread:$0]  %s2, 768, %s206, [#allocation6], 64, 64, 4
        $region16: #{tpu_custom_call.1} parent=11 // pred_fallthru
          _
        // Predicated region
        $region17: #{tpu_custom_call.1} parent=11 // pred_check
          %p212 = pneg %p116
        $region18: #{tpu_custom_call.1} parent=11 // pred_check_branch
          %214 = sbr.rel (%p212) target = $region20
        $region19: #{tpu_custom_call.1} parent=11 // pred_region
          _
        $region20: #{tpu_custom_call.1} parent=11 // pred_fallthru
          _
        // Predicated region
        $region21: #{tpu_custom_call.1} parent=11 // pred_check
          %p215 = pneg %p137
        $region22: #{tpu_custom_call.1} parent=11 // pred_check_branch
          %217 = sbr.rel (%p215) target = $region24
        $region23: #{tpu_custom_call.1} parent=11 // pred_region
          %s219 = ssub.s32 256, 256
          %220 = vsyncadd [#allocation9], %s219
          %s221 = sshll.u32 [#allocation8], 4
          %s222 = int_to_ptr.vmem [resolvable:$true] %s221
          %227 = dma.hbm_to_vmem [thread:$0]  %s4, 256, %s222, [#allocation9], 64, 64, 4
        $region24: #{tpu_custom_call.1} parent=11 // pred_fallthru
          _
        // Predicated region
        $region25: #{tpu_custom_call.1} parent=11 // pred_check
          %p228 = pneg %p158
        $region26: #{tpu_custom_call.1} parent=11 // pred_check_branch
          %230 = sbr.rel (%p228) target = $region28
        $region27: #{tpu_custom_call.1} parent=11 // pred_region
          _
        $region28: #{tpu_custom_call.1} parent=11 // pred_fallthru
          _
      $region12: #{tpu_custom_call.1} parent=5 // pred_fallthru
        _
      %p231 = scmp.lt.s32.totalorder %s22, 2
      // Predicated region
      $region29: #{tpu_custom_call.1} parent=5 // pred_check
        %p232 = pneg %p231
      $region30: #{tpu_custom_call.1} parent=5 // pred_check_branch
        %234 = sbr.rel (%p232) target = $region32
      $region31: #{tpu_custom_call.1} parent=5 // pred_region
        // Predicated region
        $region33: #{tpu_custom_call.1} parent=31 // pred_check
          %p235 = pneg %p42
        $region34: #{tpu_custom_call.1} parent=31 // pred_check_branch
          %237 = sbr.rel (%p235) target = $region36
        $region35: #{tpu_custom_call.1} parent=31 // pred_region
          %s238 = sand.u32 %s32, 1
          %s239 = scalar_lea.sflag [#allocation3], %s238
          %s240 = sand.u32 %s32, 1
          %s241 = scalar_lea.vmem [#allocation2], %s240
          %s243 = ssub.s32 16, 16
          %244 = vsyncadd %s239, %s243
          %s245 = smul.addr %s22, 16
          %s246 = scalar_lea.hbm %s0, %s245
          %s248 = sshll.u32 %s241, 4
          %s249 = int_to_ptr.vmem [resolvable:$true] %s248
          %251 = dma.hbm_to_vmem [thread:$0]  %s246, 16, %s249, %s239
        $region36: #{tpu_custom_call.1} parent=31 // pred_fallthru
          _
        // Predicated region
        $region37: #{tpu_custom_call.1} parent=31 // pred_check
          %p252 = pneg %p68
        $region38: #{tpu_custom_call.1} parent=31 // pred_check_branch
          %254 = sbr.rel (%p252) target = $region40
        $region39: #{tpu_custom_call.1} parent=31 // pred_region
          %s255 = sand.u32 %s22, 1
          %s256 = scalar_lea.sflag [#allocation6], %s255
          %s257 = sand.u32 %s58, 1
          %s258 = smul.addr %s257, 8
          %s259 = scalar_lea.vmem [#allocation5], %s258
          %s261 = ssub.s32 128, 128
          %262 = vsyncadd %s256, %s261
          %s263 = smul.addr %s22, 128
          %s264 = scalar_lea.hbm %s1, %s263
          %s266 = sshll.u32 %s259, 4
          %s267 = int_to_ptr.vmem [resolvable:$true] %s266
          %269 = dma.hbm_to_vmem [thread:$0]  %s264, 128, %s267, %s256
        $region40: #{tpu_custom_call.1} parent=31 // pred_fallthru
          _
      $region32: #{tpu_custom_call.1} parent=5 // pred_fallthru
        _
      %p270 = scmp.le.s32.totalorder 1, %s22
      %p271 = scmp.lt.s32.totalorder %s22, 3
      %p272 = pnand %p270, %p271
      %p273 = pneg %p272
      // Predicated region
      $region41: #{tpu_custom_call.1} parent=5 // pred_check
        _
      $region42: #{tpu_custom_call.1} parent=5 // pred_check_branch
        %275 = sbr.rel (%p272) target = $region44
      $region43: #{tpu_custom_call.1} parent=5 // pred_region
        %s276 = ssub.s32 %s22, 1
        %s277 = sand.u32 %s35, 1
        %s278 = scalar_lea.sflag [#allocation3], %s277
        %s279 = sand.u32 %s35, 1
        %s280 = scalar_lea.vmem [#allocation2], %s279
        // Predicated region
        $region45: #{tpu_custom_call.1} parent=43 // pred_check
          %p281 = pneg %p48
        $region46: #{tpu_custom_call.1} parent=43 // pred_check_branch
          %283 = sbr.rel (%p281) target = $region48
        $region47: #{tpu_custom_call.1} parent=43 // pred_region
          %284 = dma.done %s278, 16
        $region48: #{tpu_custom_call.1} parent=43 // pred_fallthru
          _
        %s285 = sand.u32 %s27, 1
        %s286 = scalar_lea.sflag [#allocation6], %s285
        %s287 = sand.u32 %s61, 1
        %s288 = smul.addr %s287, 8
        %s289 = scalar_lea.vmem [#allocation5], %s288
        // Predicated region
        $region49: #{tpu_custom_call.1} parent=43 // pred_check
          %p290 = pneg %p74
        $region50: #{tpu_custom_call.1} parent=43 // pred_check_branch
          %292 = sbr.rel (%p290) target = $region52
        $region51: #{tpu_custom_call.1} parent=43 // pred_region
          %293 = dma.done %s286, 128
        $region52: #{tpu_custom_call.1} parent=43 // pred_fallthru
          _
        // Predicated region
        $region53: #{tpu_custom_call.1} parent=43 // pred_check
          %p294 = pneg %p95
        $region54: #{tpu_custom_call.1} parent=43 // pred_check_branch
          %296 = sbr.rel (%p294) target = $region56
        $region55: #{tpu_custom_call.1} parent=43 // pred_region
          %297 = dma.done [#allocation6], 768
        $region56: #{tpu_custom_call.1} parent=43 // pred_fallthru
          _
        // Predicated region
        $region57: #{tpu_custom_call.1} parent=43 // pred_check
          %p298 = pneg %p137
        $region58: #{tpu_custom_call.1} parent=43 // pred_check_branch
          %300 = sbr.rel (%p298) target = $region60
        $region59: #{tpu_custom_call.1} parent=43 // pred_region
          %301 = dma.done [#allocation9], 256
        $region60: #{tpu_custom_call.1} parent=43 // pred_fallthru
          _
        %s302 = sand.u32 %s35, 1
        %s303 = scalar_lea.sflag [#allocation3], %s302
        %s304 = sand.u32 %s35, 1
        %s305 = scalar_lea.vmem [#allocation2], %s304
        %p306 = pneg %p48
        %p307 = pneg %p45
        %s308 = sand.u32 %s27, 1
        %s309 = scalar_lea.sflag [#allocation6], %s308
        %s310 = sand.u32 %s61, 1
        %s311 = smul.addr %s310, 8
        %s312 = scalar_lea.vmem [#allocation5], %s311
        %p313 = pneg %p74
        %p314 = pneg %p71
        %p315 = pneg %p95
        %p316 = pneg %p92
        %p317 = pneg %p116
        %p318 = pneg %p113
        %p319 = pneg %p137
        %p320 = pneg %p134
        %p321 = pneg %p158
        %p322 = pneg %p155
        %p323 = pneg %p184
        %p324 = pneg %p181
        %s325 = sand.u32 %s171, 1
        %s326 = scalar_lea.sflag [#allocation4], %s325
        %s327 = sand.u32 %s171, 1
        %s328 = smul.addr %s327, 8
        %s329 = scalar_lea.vmem [#allocation10], %s328
        %v331 = vld [vmem:[%s289] sm:$0xff]
        %v332 = vpack.c.bf16 %v331, %v331
        %v333 = vld [vmem:[#allocation7] sm:$0xf]
        %v334 = vld [vmem:[#allocation7 + $0x4] sm:$0xf]
        %v335 = vld [vmem:[#allocation7 + $0x8] sm:$0xf]
        %v336 = vld [vmem:[#allocation7 + $0xc] sm:$0xf]
        %v337 = vld [vmem:[%s3] sm:$0x1]
        %v338 = vlaneseq
        %v339 = vshrl.u32 %v338, 7
        %v340 = vsub.s32 0, %v339
        %v341 = vrot.slane %v337, %v340
        %v346 = vunpack.c.l.b16 %v333
        %v347 = vunpack.c.l.b16 %v334
        %v348 = vunpack.c.l.b16 %v335
        %v349 = vunpack.c.l.b16 %v336
        %v350 = vpack.c.b16 %v347, %v346
        %v351 = vpack.c.b16 %v349, %v348
        %vm354 = vcmask 261120
        %v356 = vsel %vm354, %v332, 0
        %358 = vmatprep.subr.bf16.mxu0 0
        %359 = vmatpush1.bf16.msra.mxu0 %v350
        %360 = vmatprep.subr.bf16.mxu0 0
        %361 = vmatpush1.bf16.msra.mxu0 %v351
        %362 = vmatprep.subr.bf16.mxu0 0
        %363 = vmatpush1.bf16.msra.mxu0 0
        %364 = vmatprep.subr.bf16.mxu0 0
        %365 = vmatpush1.bf16.msra.mxu0 0
        %366 = vmatprep.subr.bf16.mxu0 0
        %367 = vmatpush1.bf16.msra.mxu0 0
        %368 = vmatprep.subr.bf16.mxu0 0
        %369 = vmatpush1.bf16.msra.mxu0 0
        %370 = vmatprep.subr.bf16.mxu0 0
        %371 = vmatpush1.bf16.msra.mxu0 0
        %372 = vmatprep.subr.bf16.mxu0 0
        %373 = vmatpush1.bf16.msra.mxu0 0
        %374 = vmatprep.subr.bf16.mxu0 0
        %375 = vmatpush1.bf16.msra.mxu0 0
        %376 = vmatprep.subr.bf16.mxu0 0
        %377 = vmatpush1.bf16.msra.mxu0 0
        %378 = vmatprep.subr.bf16.mxu0 0
        %379 = vmatpush1.bf16.msra.mxu0 0
        %380 = vmatprep.subr.bf16.mxu0 0
        %381 = vmatpush1.bf16.msra.mxu0 0
        %382 = vmatprep.subr.bf16.mxu0 0
        %383 = vmatpush1.bf16.msra.mxu0 0
        %384 = vmatprep.subr.bf16.mxu0 0
        %385 = vmatpush1.bf16.msra.mxu0 0
        %386 = vmatprep.subr.bf16.mxu0 0
        %387 = vmatpush1.bf16.msra.mxu0 0
        %388 = vmatprep.subr.bf16.mxu0 0
        %389 = vmatpush1.bf16.msra.mxu0 0
        %390 = vmatprep.mubr.bf16.mxu0 0
        %391 = vmatmul.mubr.bf16.gmra.mrb[0].mxu0 %v356
        %v392 = vpop.f32.mrb[0].mxu0
        %v393 = vadd.f32 %v341, %v392
        %v394 = vpop.f32.mrb[0].mxu0
        %v395 = vpop.f32.mrb[0].mxu0
        %v396 = vpop.f32.mrb[0].mxu0
        %397 = vdwg.mxu0
        %s398 = scalar_lea.vmem [#allocation7], 16
        %v399 = vld [vmem:[%s398] sm:$0xf]
        %v400 = vld [vmem:[%s398 + $0x4] sm:$0xf]
        %v401 = vld [vmem:[%s398 + $0x8] sm:$0xf]
        %v402 = vld [vmem:[%s398 + $0xc] sm:$0xf]
        %v403 = vld [vmem:[%s3 + $0x1] sm:$0x1]
        %v404 = vlaneseq
        %v405 = vshrl.u32 %v404, 7
        %v406 = vsub.s32 0, %v405
        %v407 = vrot.slane %v403, %v406
        %v412 = vunpack.c.l.b16 %v399
        %v413 = vunpack.c.l.b16 %v400
        %v414 = vunpack.c.l.b16 %v401
        %v415 = vunpack.c.l.b16 %v402
        %v416 = vpack.c.b16 %v413, %v412
        %v417 = vpack.c.b16 %v415, %v414
        %420 = vmatprep.subr.bf16.mxu0 0
        %421 = vmatpush1.bf16.msra.mxu0 %v416
        %422 = vmatprep.subr.bf16.mxu0 0
        %423 = vmatpush1.bf16.msra.mxu0 %v417
        %424 = vmatprep.subr.bf16.mxu0 0
        %425 = vmatpush1.bf16.msra.mxu0 0
        %426 = vmatprep.subr.bf16.mxu0 0
        %427 = vmatpush1.bf16.msra.mxu0 0
        %428 = vmatprep.subr.bf16.mxu0 0
        %429 = vmatpush1.bf16.msra.mxu0 0
        %430 = vmatprep.subr.bf16.mxu0 0
        %431 = vmatpush1.bf16.msra.mxu0 0
        %432 = vmatprep.subr.bf16.mxu0 0
        %433 = vmatpush1.bf16.msra.mxu0 0
        %434 = vmatprep.subr.bf16.mxu0 0
        %435 = vmatpush1.bf16.msra.mxu0 0
        %436 = vmatprep.subr.bf16.mxu0 0
        %437 = vmatpush1.bf16.msra.mxu0 0
        %438 = vmatprep.subr.bf16.mxu0 0
        %439 = vmatpush1.bf16.msra.mxu0 0
        %440 = vmatprep.subr.bf16.mxu0 0
        %441 = vmatpush1.bf16.msra.mxu0 0
        %442 = vmatprep.subr.bf16.mxu0 0
        %443 = vmatpush1.bf16.msra.mxu0 0
        %444 = vmatprep.subr.bf16.mxu0 0
        %445 = vmatpush1.bf16.msra.mxu0 0
        %446 = vmatprep.subr.bf16.mxu0 0
        %447 = vmatpush1.bf16.msra.mxu0 0
        %448 = vmatprep.subr.bf16.mxu0 0
        %449 = vmatpush1.bf16.msra.mxu0 0
        %450 = vmatprep.subr.bf16.mxu0 0
        %451 = vmatpush1.bf16.msra.mxu0 0
        %452 = vmatprep.mubr.bf16.mxu0 0
        %453 = vmatmul.mubr.bf16.gmra.mrb[0].mxu0 %v356
        %v454 = vpop.f32.mrb[0].mxu0
        %v455 = vadd.f32 %v407, %v454
        %v456 = vpop.f32.mrb[0].mxu0
        %v457 = vpop.f32.mrb[0].mxu0
        %v458 = vpop.f32.mrb[0].mxu0
        %459 = vdwg.mxu0
        %s460 = scalar_lea.vmem [#allocation7], 32
        %v461 = vld [vmem:[%s460] sm:$0xf]
        %v462 = vld [vmem:[%s460 + $0x4] sm:$0xf]
        %v463 = vld [vmem:[%s460 + $0x8] sm:$0xf]
        %v464 = vld [vmem:[%s460 + $0xc] sm:$0xf]
        %v465 = vld [vmem:[%s3 + $0x2] sm:$0x1]
        %v466 = vlaneseq
        %v467 = vshrl.u32 %v466, 7
        %v468 = vsub.s32 0, %v467
        %v469 = vrot.slane %v465, %v468
        %v474 = vunpack.c.l.b16 %v461
        %v475 = vunpack.c.l.b16 %v462
        %v476 = vunpack.c.l.b16 %v463
        %v477 = vunpack.c.l.b16 %v464
        %v478 = vpack.c.b16 %v475, %v474
        %v479 = vpack.c.b16 %v477, %v476
        %482 = vmatprep.subr.bf16.mxu0 0
        %483 = vmatpush1.bf16.msra.mxu0 %v478
        %484 = vmatprep.subr.bf16.mxu0 0
        %485 = vmatpush1.bf16.msra.mxu0 %v479
        %486 = vmatprep.subr.bf16.mxu0 0
        %487 = vmatpush1.bf16.msra.mxu0 0
        %488 = vmatprep.subr.bf16.mxu0 0
        %489 = vmatpush1.bf16.msra.mxu0 0
        %490 = vmatprep.subr.bf16.mxu0 0
        %491 = vmatpush1.bf16.msra.mxu0 0
        %492 = vmatprep.subr.bf16.mxu0 0
        %493 = vmatpush1.bf16.msra.mxu0 0
        %494 = vmatprep.subr.bf16.mxu0 0
        %495 = vmatpush1.bf16.msra.mxu0 0
        %496 = vmatprep.subr.bf16.mxu0 0
        %497 = vmatpush1.bf16.msra.mxu0 0
        %498 = vmatprep.subr.bf16.mxu0 0
        %499 = vmatpush1.bf16.msra.mxu0 0
        %500 = vmatprep.subr.bf16.mxu0 0
        %501 = vmatpush1.bf16.msra.mxu0 0
        %502 = vmatprep.subr.bf16.mxu0 0
        %503 = vmatpush1.bf16.msra.mxu0 0
        %504 = vmatprep.subr.bf16.mxu0 0
        %505 = vmatpush1.bf16.msra.mxu0 0
        %506 = vmatprep.subr.bf16.mxu0 0
        %507 = vmatpush1.bf16.msra.mxu0 0
        %508 = vmatprep.subr.bf16.mxu0 0
        %509 = vmatpush1.bf16.msra.mxu0 0
        %510 = vmatprep.subr.bf16.mxu0 0
        %511 = vmatpush1.bf16.msra.mxu0 0
        %512 = vmatprep.subr.bf16.mxu0 0
        %513 = vmatpush1.bf16.msra.mxu0 0
        %514 = vmatprep.mubr.bf16.mxu0 0
        %515 = vmatmul.mubr.bf16.gmra.mrb[0].mxu0 %v356
        %v516 = vpop.f32.mrb[0].mxu0
        %v517 = vadd.f32 %v469, %v516
        %v518 = vpop.f32.mrb[0].mxu0
        %v519 = vpop.f32.mrb[0].mxu0
        %v520 = vpop.f32.mrb[0].mxu0
        %521 = vdwg.mxu0
        %v522 = vmul.f32 %v393, 0.17677669
        %v523 = vpack.c.bf16 %v522, %v522
        %v524 = vpack.c.bf16 %v455, %v455
        %v526 = vsel %vm354, %v523, 0
        %v529 = vsel %vm354, %v524, 0
        %531 = vmatprep.subr.bf16.mxu0 0
        %532 = vmatpush1.bf16.xpose.msra.mxu0 %v529
        %533 = vmatprep.subr.bf16.mxu0 0
        %534 = vmatpush1.bf16.xpose.msra.mxu0 0
        %535 = vmatprep.subr.bf16.mxu0 0
        %536 = vmatpush1.bf16.xpose.msra.mxu0 0
        %537 = vmatprep.subr.bf16.mxu0 0
        %538 = vmatpush1.bf16.xpose.msra.mxu0 0
        %539 = vmatprep.subr.bf16.mxu0 0
        %540 = vmatpush1.bf16.xpose.msra.mxu0 0
        %541 = vmatprep.subr.bf16.mxu0 0
        %542 = vmatpush1.bf16.xpose.msra.mxu0 0
        %543 = vmatprep.subr.bf16.mxu0 0
        %544 = vmatpush1.bf16.xpose.msra.mxu0 0
        %545 = vmatprep.subr.bf16.mxu0 0
        %546 = vmatpush1.bf16.xpose.msra.mxu0 0
        %547 = vmatprep.subr.bf16.mxu0 0
        %548 = vmatpush1.bf16.xpose.msra.mxu0 0
        %549 = vmatprep.subr.bf16.mxu0 0
        %550 = vmatpush1.bf16.xpose.msra.mxu0 0
        %551 = vmatprep.subr.bf16.mxu0 0
        %552 = vmatpush1.bf16.xpose.msra.mxu0 0
        %553 = vmatprep.subr.bf16.mxu0 0
        %554 = vmatpush1.bf16.xpose.msra.mxu0 0
        %555 = vmatprep.subr.bf16.mxu0 0
        %556 = vmatpush1.bf16.xpose.msra.mxu0 0
        %557 = vmatprep.subr.bf16.mxu0 0
        %558 = vmatpush1.bf16.xpose.msra.mxu0 0
        %559 = vmatprep.subr.bf16.mxu0 0
        %560 = vmatpush1.bf16.xpose.msra.mxu0 0
        %561 = vmatprep.subr.bf16.mxu0 0
        %562 = vmatpush1.bf16.xpose.msra.mxu0 0
        %563 = vmatprep.mubr.bf16.mxu0 0
        %564 = vmatmul.mubr.bf16.gmra.mrb[0].mxu0 %v526
        %v565 = vpop.f32.mrb[0].mxu0
        %v566 = vadd.f32 0.0, %v565
        %v567 = vpop.f32.mrb[0].mxu0
        %v568 = vpop.f32.mrb[0].mxu0
        %v569 = vpop.f32.mrb[0].mxu0
        %570 = vdwg.mxu0
        %v571 = vld [vmem:[%s280] sm:$0x1]
        %vm572 = vcmp.gt.s32.totalorder %v571, 0
        %v573 = vsel %vm572, 1, 0
        %v574 = vlaneseq
        %v575 = vshrl.u32 %v574, 7
        %v576 = vsub.s32 0, %v575
        %v577 = vrot.slane %v573, %v576
        %vm578 = vcmp.eq.s32.totalorder %v577, 1
        %v579 = vsel %vm578, %v566, -1e+30
        %vm580 = vcmask 64512
        %v581 = vsel %vm580, %v579, -inf
        %582 = vmax.xlane.f32.xlu0 %v581
        %v583 = vpop.xlane.xlu0 %582
        %v584 = vsub.f32 %v579, %v583
        %v585 = vmul.f32 %v584, 1.442695
        %v586 = vpow.pop %v585
        %v587 = vsel %vm580, %v586, 0.0
        %588 = vadd.xlane.f32.xlu0 %v587
        %v589 = vpop.xlane.xlu0 %588
        %v590 = vrcp.pop %v589
        %v591 = vmul.f32 %v586, %v590
        %v592 = vpack.c.bf16 %v591, %v591
        %v593 = vpack.c.bf16 %v517, %v517
        %v595 = vsel %vm580, %v592, 0
        %vm597 = vcmask 1043456
        %v599 = vsel %vm597, %v593, 0
        %601 = vmatprep.subr.bf16.mxu0 0
        %602 = vmatpush1.bf16.msra.mxu0 %v599
        %603 = vmatprep.subr.bf16.mxu0 0
        %604 = vmatpush1.bf16.msra.mxu0 0
        %605 = vmatprep.subr.bf16.mxu0 0
        %606 = vmatpush1.bf16.msra.mxu0 0
        %607 = vmatprep.subr.bf16.mxu0 0
        %608 = vmatpush1.bf16.msra.mxu0 0
        %609 = vmatprep.subr.bf16.mxu0 0
        %610 = vmatpush1.bf16.msra.mxu0 0
        %611 = vmatprep.subr.bf16.mxu0 0
        %612 = vmatpush1.bf16.msra.mxu0 0
        %613 = vmatprep.subr.bf16.mxu0 0
        %614 = vmatpush1.bf16.msra.mxu0 0
        %615 = vmatprep.subr.bf16.mxu0 0
        %616 = vmatpush1.bf16.msra.mxu0 0
        %617 = vmatprep.subr.bf16.mxu0 0
        %618 = vmatpush1.bf16.msra.mxu0 0
        %619 = vmatprep.subr.bf16.mxu0 0
        %620 = vmatpush1.bf16.msra.mxu0 0
        %621 = vmatprep.subr.bf16.mxu0 0
        %622 = vmatpush1.bf16.msra.mxu0 0
        %623 = vmatprep.subr.bf16.mxu0 0
        %624 = vmatpush1.bf16.msra.mxu0 0
        %625 = vmatprep.subr.bf16.mxu0 0
        %626 = vmatpush1.bf16.msra.mxu0 0
        %627 = vmatprep.subr.bf16.mxu0 0
        %628 = vmatpush1.bf16.msra.mxu0 0
        %629 = vmatprep.subr.bf16.mxu0 0
        %630 = vmatpush1.bf16.msra.mxu0 0
        %631 = vmatprep.subr.bf16.mxu0 0
        %632 = vmatpush1.bf16.msra.mxu0 0
        %633 = vmatprep.mubr.bf16.mxu0 0
        %634 = vmatmul.mubr.bf16.gmra.mrb[0].mxu0 %v595
        %v635 = vpop.f32.mrb[0].mxu0
        %v636 = vadd.f32 0.0, %v635
        %v637 = vpop.f32.mrb[0].mxu0
        %v638 = vpop.f32.mrb[0].mxu0
        %v639 = vpop.f32.mrb[0].mxu0
        %640 = vdwg.mxu0
        %v641 = vpack.c.bf16 %v636, %v636
        %v642 = vld [vmem:[#allocation8] sm:$0xf]
        %v643 = vld [vmem:[#allocation8 + $0x4] sm:$0xf]
        %v644 = vld [vmem:[#allocation8 + $0x8] sm:$0xf]
        %v645 = vld [vmem:[#allocation8 + $0xc] sm:$0xf]
        %v646 = vld [vmem:[%s5] sm:$0x1]
        %v647 = vlaneseq
        %v648 = vshrl.u32 %v647, 7
        %v649 = vsub.s32 0, %v648
        %v650 = vrot.slane %v646, %v649
        %v655 = vunpack.c.l.b16 %v642
        %v656 = vunpack.c.l.b16 %v643
        %v657 = vunpack.c.l.b16 %v644
        %v658 = vunpack.c.l.b16 %v645
        %v659 = vpack.c.b16 %v656, %v655
        %v660 = vpack.c.b16 %v658, %v657
        %v664 = vsel %vm354, %v641, 0
        %666 = vmatprep.subr.bf16.mxu0 0
        %667 = vmatpush1.bf16.msra.mxu0 %v659
        %668 = vmatprep.subr.bf16.mxu0 0
        %669 = vmatpush1.bf16.msra.mxu0 %v660
        %670 = vmatprep.subr.bf16.mxu0 0
        %671 = vmatpush1.bf16.msra.mxu0 0
        %672 = vmatprep.subr.bf16.mxu0 0
        %673 = vmatpush1.bf16.msra.mxu0 0
        %674 = vmatprep.subr.bf16.mxu0 0
        %675 = vmatpush1.bf16.msra.mxu0 0
        %676 = vmatprep.subr.bf16.mxu0 0
        %677 = vmatpush1.bf16.msra.mxu0 0
        %678 = vmatprep.subr.bf16.mxu0 0
        %679 = vmatpush1.bf16.msra.mxu0 0
        %680 = vmatprep.subr.bf16.mxu0 0
        %681 = vmatpush1.bf16.msra.mxu0 0
        %682 = vmatprep.subr.bf16.mxu0 0
        %683 = vmatpush1.bf16.msra.mxu0 0
        %684 = vmatprep.subr.bf16.mxu0 0
        %685 = vmatpush1.bf16.msra.mxu0 0
        %686 = vmatprep.subr.bf16.mxu0 0
        %687 = vmatpush1.bf16.msra.mxu0 0
        %688 = vmatprep.subr.bf16.mxu0 0
        %689 = vmatpush1.bf16.msra.mxu0 0
        %690 = vmatprep.subr.bf16.mxu0 0
        %691 = vmatpush1.bf16.msra.mxu0 0
        %692 = vmatprep.subr.bf16.mxu0 0
        %693 = vmatpush1.bf16.msra.mxu0 0
        %694 = vmatprep.subr.bf16.mxu0 0
        %695 = vmatpush1.bf16.msra.mxu0 0
        %696 = vmatprep.subr.bf16.mxu0 0
        %697 = vmatpush1.bf16.msra.mxu0 0
        %698 = vmatprep.mubr.bf16.mxu0 0
        %699 = vmatmul.mubr.bf16.gmra.mrb[0].mxu0 %v664
        %v700 = vpop.f32.mrb[0].mxu0
        %v701 = vadd.f32 %v650, %v700
        %v702 = vpop.f32.mrb[0].mxu0
        %v703 = vpop.f32.mrb[0].mxu0
        %v704 = vpop.f32.mrb[0].mxu0
        %705 = vdwg.mxu0
        %v706 = vadd.f32 %v331, %v701
        %v707 = vsel %vm354, %v706, 0.0
        %708 = vadd.xlane.f32.xlu0 %v707
        %v709 = vpop.xlane.xlu0 %708
        %v710 = vrcp.pop 32.0
        %v711 = vmul.f32 %v709, %v710
        %v712 = vsub.f32 %v706, %v711
        %v713 = vmul.f32 %v712, %v712
        %v714 = vsel %vm354, %v713, 0.0
        %715 = vadd.xlane.f32.xlu0 %v714
        %v716 = vpop.xlane.xlu0 %715
        %v717 = vmul.f32 %v716, %v710
        %v718 = vadd.f32 %v717, 1e-05
        %v719 = vrsqrt.pop %v718
        %v720 = vmul.f32 %v712, %v719
        %v721 = vld [vmem:[%s5 + $0x1] sm:$0x1]
        %v722 = vlaneseq
        %v723 = vshrl.u32 %v722, 7
        %v724 = vsub.s32 0, %v723
        %v725 = vrot.slane %v721, %v724
        %v726 = vmul.f32 %v720, %v725
        %v727 = vld [vmem:[%s5 + $0x2] sm:$0x1]
        %v728 = vlaneseq
        %v729 = vshrl.u32 %v728, 7
        %v730 = vsub.s32 0, %v729
        %v731 = vrot.slane %v727, %v730
        %v732 = vadd.f32 %v726, %v731
        %733 = vst.msk [vmem:[%s329] sm:$0xff] %vm354, %v732
        %s734 = sand.u32 %s171, 1
        %s735 = scalar_lea.sflag [#allocation4], %s734
        %s736 = sand.u32 %s171, 1
        %s737 = smul.addr %s736, 8
        %s738 = scalar_lea.vmem [#allocation10], %s737
        // Predicated region
        $region61: #{tpu_custom_call.1} parent=43 // pred_check
          %p739 = pneg %p181
        $region62: #{tpu_custom_call.1} parent=43 // pred_check_branch
          %741 = sbr.rel (%p739) target = $region64
        $region63: #{tpu_custom_call.1} parent=43 // pred_region
          %s743 = ssub.s32 128, 128
          %744 = vsyncadd %s735, %s743
          %s745 = smul.addr %s27, 128
          %s746 = scalar_lea.hbm %s6, %s745
          %s748 = sshll.u32 %s738, 4
          %s749 = int_to_ptr.vmem [resolvable:$true] %s748
          %751 = dma.vmem_to_hbm [thread:$0]  %s749, 128, %s746, %s735
        $region64: #{tpu_custom_call.1} parent=43 // pred_fallthru
          _
      $region44: #{tpu_custom_call.1} parent=5 // pred_fallthru
        _
      %p752 = scmp.le.s32.totalorder 2, %s22
      // Predicated region
      $region65: #{tpu_custom_call.1} parent=5 // pred_check
        %p753 = pneg %p752
      $region66: #{tpu_custom_call.1} parent=5 // pred_check_branch
        %755 = sbr.rel (%p753) target = $region68
      $region67: #{tpu_custom_call.1} parent=5 // pred_region
        %s756 = ssub.s32 %s22, 2
        // Predicated region
        $region69: #{tpu_custom_call.1} parent=67 // pred_check
          %p757 = pneg %p187
        $region70: #{tpu_custom_call.1} parent=67 // pred_check_branch
          %759 = sbr.rel (%p757) target = $region72
        $region71: #{tpu_custom_call.1} parent=67 // pred_region
          %s760 = sand.u32 %s172, 1
          %s761 = scalar_lea.sflag [#allocation4], %s760
          %s762 = sand.u32 %s172, 1
          %s763 = smul.addr %s762, 8
          %s764 = scalar_lea.vmem [#allocation10], %s763
          %765 = dma.done %s761, 128
        $region72: #{tpu_custom_call.1} parent=67 // pred_fallthru
          _
      $region68: #{tpu_custom_call.1} parent=5 // pred_fallthru
        _
    $region6: #{tpu_custom_call.1} parent=1 // loop_footer
      %s26 = sadd.s32 1, %s22
    $region7: #{tpu_custom_call.1} parent=1 // loop_footer_branch
      %21 = sbr.rel target = $region3
    $region8: #{tpu_custom_call.1} parent=1 // loop_exit
      _
    %766 = vsyncpa [#allocation3], 1
    %s767 = scalar_lea.sflag [#allocation3], 1
    %768 = vsyncpa %s767, 1
    %769 = vsyncpa [#allocation6], 1
    %s770 = scalar_lea.sflag [#allocation6], 1
    %771 = vsyncpa %s770, 1
    %772 = vsyncpa [#allocation9], 1
    %773 = vsyncpa [#allocation4], 1
    %s774 = scalar_lea.sflag [#allocation4], 1
    %775 = vsyncpa %s774, 1

</llo_original>
